<compile_context>
chip_gen: v6e
topology: v6e:2x2x1
jax: 0.10.0
libtpu: 0.0.40
codegen_flags: <defaults>
</compile_context>

<pallas_src>
import functools

import jax
import jax.numpy as jnp
from jax.experimental import pallas as pl
from jax.experimental.pallas import tpu as pltpu

LANE = 128


def _round_up(x, m):
    return (x + m - 1) // m * m


# Row indices into the packed "vec" slab ([N_VEC_ROWS, width]) built by pack_params.
ROW_LN0_G, ROW_LN0_B = 0, 1          # MLPBase.feature_norm  (width d_pad)
ROW_LN1_G, ROW_LN1_B = 2, 3          # fc1 LayerNorm         (width h_pad)
ROW_LN2_G, ROW_LN2_B = 4, 5          # fc2 LayerNorm         (width h_pad)
ROW_LNR_G, ROW_LNR_B = 6, 7          # RNNLayer.norm         (width h_pad)
ROW_B1, ROW_B2 = 8, 9                # fc1 / fc2 biases      (width h_pad)
ROW_BGRU = 10                        # [b_ir+b_hr | b_iz+b_hz | b_in]  (width 3*h_pad)
ROW_BHN = 11                         # b_hn                  (width h_pad)
ROW_WV = 12                          # v_out weight as a row (width h_pad)
ROW_BV = 13                          # v_out bias at lane 0 (rest of row is zero)
N_VEC_ROWS = 16                      # padded to a sublane multiple


def r_critic_kernel(obs_ref, h_ref, mask_ref, w_mlp_ref, w_gru_ref, vec_ref,
                    values_ref, h_out_ref, *, d_real, h_real, d_pad, h_pad):
    f32 = jnp.float32

    def layernorm(x, g_row, b_row, count):
        # LayerNorm over the `count` real lanes of a lane-padded [B, P] tile.
        # Padded lanes of x are zero, so full-lane sums equal real-lane sums; the
        # valid mask only removes the (-mu)^2 contribution of padded lanes.
        lanes = jax.lax.broadcasted_iota(jnp.int32, x.shape, 1)
        valid = (lanes < count).astype(f32)
        inv_n = 1.0 / count
        mu = jnp.sum(x, axis=-1, keepdims=True) * inv_n
        dev = (x - mu) * valid
        var = jnp.sum(dev * dev, axis=-1, keepdims=True) * inv_n
        return dev * jax.lax.rsqrt(var + 1e-5) * g_row + b_row

    # ---- MLPBase: feature LayerNorm -> fc1 (Linear+ReLU+LN) -> fc2 (Linear+ReLU+LN)
    x = layernorm(obs_ref[...],
                  vec_ref[ROW_LN0_G:ROW_LN0_G + 1, :d_pad],
                  vec_ref[ROW_LN0_B:ROW_LN0_B + 1, :d_pad], d_real)
    x = jnp.dot(x, w_mlp_ref[0:d_pad, :], preferred_element_type=f32)
    x = jnp.maximum(x + vec_ref[ROW_B1:ROW_B1 + 1, :h_pad], 0.0)
    x = layernorm(x, vec_ref[ROW_LN1_G:ROW_LN1_G + 1, :h_pad],
                  vec_ref[ROW_LN1_B:ROW_LN1_B + 1, :h_pad], h_real)
    x = jnp.dot(x, w_mlp_ref[d_pad:d_pad + h_pad, :], preferred_element_type=f32)
    x = jnp.maximum(x + vec_ref[ROW_B2:ROW_B2 + 1, :h_pad], 0.0)
    x = layernorm(x, vec_ref[ROW_LN2_G:ROW_LN2_G + 1, :h_pad],
                  vec_ref[ROW_LN2_B:ROW_LN2_B + 1, :h_pad], h_real)

    # ---- RNNLayer: masked hidden state + single-step GRU (recurrent_N = 1), gates fused.
    h = h_ref[...] * mask_ref[...]                            # [B,1] broadcasts over lanes
    xg = (jnp.dot(x, w_gru_ref[0:h_pad, :], preferred_element_type=f32)
          + vec_ref[ROW_BGRU:ROW_BGRU + 1, :3 * h_pad])       # [B, 3*h_pad]
    hg = jnp.dot(h, w_gru_ref[h_pad:2 * h_pad, :], preferred_element_type=f32)
    r = jax.nn.sigmoid(xg[:, 0:h_pad] + hg[:, 0:h_pad])
    z = jax.nn.sigmoid(xg[:, h_pad:2 * h_pad] + hg[:, h_pad:2 * h_pad])
    n = jnp.tanh(xg[:, 2 * h_pad:3 * h_pad]
                 + r * (hg[:, 2 * h_pad:3 * h_pad] + vec_ref[ROW_BHN:ROW_BHN + 1, :h_pad]))
    h_new = (1.0 - z) * n + z * h
    h_out_ref[...] = h_new                                    # lane-dense [B, h_pad] store

    # ---- RNNLayer output LayerNorm, then v_out Linear(hidden, 1) as VPU mul + lane reduce
    feat = layernorm(h_new, vec_ref[ROW_LNR_G:ROW_LNR_G + 1, :h_pad],
                     vec_ref[ROW_LNR_B:ROW_LNR_B + 1, :h_pad], h_real)
    v = jnp.sum(feat * vec_ref[ROW_WV:ROW_WV + 1, :h_pad], axis=-1, keepdims=True)
    # bv lives at lane 0 of an otherwise-zero row; reduce it out (avoids a [1,1] slice load).
    bv = jnp.sum(vec_ref[ROW_BV:ROW_BV + 1, :h_pad], axis=-1, keepdims=True)
    values_ref[...] = v + bv


def pack_params(params, obs_dim, hidden):
    """Pack the 26 module parameters into 3 lane-padded slabs (done once, outside the kernel)."""
    d_pad = _round_up(obs_dim, LANE)
    h_pad = _round_up(hidden, LANE)
    width = max(d_pad, 3 * h_pad)

    def pad2(a, rows, cols):
        a = a.astype(jnp.float32)
        return jnp.pad(a, ((0, rows - a.shape[0]), (0, cols - a.shape[1])))

    # Weight slab #1: fc1 stacked over fc2, both [*, h_pad].
    w_mlp = jnp.concatenate([pad2(params["w1"], d_pad, h_pad),
                             pad2(params["w2"], h_pad, h_pad)], axis=0)

    # Weight slab #2: fused GRU gate weights, W_i stacked over W_h, each [h_pad, 3*h_pad].
    w_i = jnp.concatenate([pad2(params["w_ir"], h_pad, h_pad),
                           pad2(params["w_iz"], h_pad, h_pad),
                           pad2(params["w_in"], h_pad, h_pad)], axis=1)
    w_h = jnp.concatenate([pad2(params["w_hr"], h_pad, h_pad),
                           pad2(params["w_hz"], h_pad, h_pad),
                           pad2(params["w_hn"], h_pad, h_pad)], axis=1)
    w_gru = jnp.concatenate([w_i, w_h], axis=0)

    # Vector slab: every [1, *] parameter as one row; r/z gate biases pre-summed.
    b_gru = jnp.concatenate([pad2(params["b_ir"] + params["b_hr"], 1, h_pad),
                             pad2(params["b_iz"] + params["b_hz"], 1, h_pad),
                             pad2(params["b_in"], 1, h_pad)], axis=1)
    rows = [
        params["ln0_g"], params["ln0_b"],
        params["ln1_g"], params["ln1_b"],
        params["ln2_g"], params["ln2_b"],
        params["lnr_g"], params["lnr_b"],
        params["b1"], params["b2"],
        b_gru,
        params["b_hn"],
        params["wv"].T,          # [hidden, 1] -> [1, hidden]
        params["bv"],            # scalar at lane 0
    ]
    vec = jnp.concatenate([pad2(r, 1, width) for r in rows], axis=0)
    vec = jnp.pad(vec, ((0, N_VEC_ROWS - vec.shape[0]), (0, 0)))

    return dict(w_mlp=w_mlp, w_gru=w_gru, vec=vec,
                obs_dim=obs_dim, hidden=hidden, d_pad=d_pad, h_pad=h_pad)


def r_critic_forward(share_obs, rnn_states, masks, packed, *, tile_b=256):
    """share_obs [B,D], rnn_states [B,1,H], masks [B,1] -> (values [B,1], rnn_states' [B,1,H])."""
    B, D = share_obs.shape
    H = packed["hidden"]
    d_pad, h_pad = packed["d_pad"], packed["h_pad"]

    tile_b = max(8, min(tile_b, _round_up(B, 8)))     # batch tile (multiple of 8 sublanes)
    b_pad = _round_up(B, tile_b)

    # Zero-pad batch to a tile multiple and features/hidden to the 128-lane width.
    obs = jnp.zeros((b_pad, d_pad), jnp.float32).at[:B, :D].set(share_obs.astype(jnp.float32))
    h_in = jnp.zeros((b_pad, h_pad), jnp.float32).at[:B, :H].set(
        rnn_states[:, 0, :].astype(jnp.float32))       # recurrent_N == 1
    msk = jnp.zeros((b_pad, 1), jnp.float32).at[:B, :].set(masks.astype(jnp.float32))

    kernel = functools.partial(r_critic_kernel, d_real=D, h_real=H, d_pad=d_pad, h_pad=h_pad)

    def batch_spec(cols):
        return pl.BlockSpec((tile_b, cols), lambda i: (i, 0))

    def full_spec(arr):
        return pl.BlockSpec(arr.shape, lambda i: (0, 0))   # replicated: fetched once

    values, h_out = pl.pallas_call(
        kernel,
        out_shape=(jax.ShapeDtypeStruct((b_pad, 1), jnp.float32),
                   jax.ShapeDtypeStruct((b_pad, h_pad), jnp.float32)),
        grid_spec=pltpu.PrefetchScalarGridSpec(
            num_scalar_prefetch=0,
            grid=(b_pad // tile_b,),
            in_specs=[
                batch_spec(d_pad),              # obs
                batch_spec(h_pad),              # hidden state
                batch_spec(1),                  # masks
                full_spec(packed["w_mlp"]),
                full_spec(packed["w_gru"]),
                full_spec(packed["vec"]),
            ],
            out_specs=(batch_spec(1), batch_spec(h_pad)),
        ),
        compiler_params=pltpu.CompilerParams(dimension_semantics=("parallel",)),
    )(obs, h_in, msk, packed["w_mlp"], packed["w_gru"], packed["vec"])

    return values[:B], h_out[:B, :H].reshape(B, 1, H)


def make_params(key, obs_dim, hidden):
    """Deterministic synthetic parameters (shapes match the PyTorch module, weights pre-transposed)."""
    ks = jax.random.split(key, 16)

    def lin(k, fan_in, fan_out):
        return (jax.random.normal(k, (fan_in, fan_out), jnp.float32)
                * (1.0 / jnp.sqrt(jnp.float32(fan_in))))

    p = {}
    p["ln0_g"] = jnp.ones((1, obs_dim), jnp.float32)
    p["ln0_b"] = jnp.zeros((1, obs_dim), jnp.float32)
    p["w1"] = lin(ks[0], obs_dim, hidden)
    p["b1"] = jnp.zeros((1, hidden), jnp.float32)
    p["ln1_g"] = jnp.ones((1, hidden), jnp.float32)
    p["ln1_b"] = jnp.zeros((1, hidden), jnp.float32)
    p["w2"] = lin(ks[1], hidden, hidden)
    p["b2"] = jnp.zeros((1, hidden), jnp.float32)
    p["ln2_g"] = jnp.ones((1, hidden), jnp.float32)
    p["ln2_b"] = jnp.zeros((1, hidden), jnp.float32)
    for i, g in enumerate(("r", "z", "n")):
        p[f"w_i{g}"] = lin(ks[2 + i], hidden, hidden)
        p[f"w_h{g}"] = lin(ks[5 + i], hidden, hidden)
        p[f"b_i{g}"] = jax.random.normal(ks[8 + i], (1, hidden), jnp.float32) * 0.01
        p[f"b_h{g}"] = jax.random.normal(ks[11 + i], (1, hidden), jnp.float32) * 0.01
    p["lnr_g"] = jnp.ones((1, hidden), jnp.float32)
    p["lnr_b"] = jnp.zeros((1, hidden), jnp.float32)
    p["wv"] = lin(ks[14], hidden, 1)
    p["bv"] = jnp.zeros((1, 1), jnp.float32)
    return p


def _layernorm(x, g, b, eps=1e-5):
    mu = jnp.mean(x, axis=-1, keepdims=True)
    var = jnp.mean(jnp.square(x - mu), axis=-1, keepdims=True)
    return (x - mu) * jax.lax.rsqrt(var + eps) * g + b


def r_critic_reference(share_obs, rnn_states, masks, params):
    """Pure-JAX reference of the same forward (for correctness check)."""
    hp = jax.lax.Precision.HIGHEST
    x = _layernorm(share_obs, params["ln0_g"], params["ln0_b"])
    x = jnp.maximum(jnp.dot(x, params["w1"], precision=hp) + params["b1"], 0.0)
    x = _layernorm(x, params["ln1_g"], params["ln1_b"])
    x = jnp.maximum(jnp.dot(x, params["w2"], precision=hp) + params["b2"], 0.0)
    x = _layernorm(x, params["ln2_g"], params["ln2_b"])
    h = rnn_states[:, 0, :] * masks
    r = jax.nn.sigmoid(jnp.dot(x, params["w_ir"], precision=hp) + params["b_ir"]
                       + jnp.dot(h, params["w_hr"], precision=hp) + params["b_hr"])
    z = jax.nn.sigmoid(jnp.dot(x, params["w_iz"], precision=hp) + params["b_iz"]
                       + jnp.dot(h, params["w_hz"], precision=hp) + params["b_hz"])
    n = jnp.tanh(jnp.dot(x, params["w_in"], precision=hp) + params["b_in"]
                 + r * (jnp.dot(h, params["w_hn"], precision=hp) + params["b_hn"]))
    h_new = (1.0 - z) * n + z * h
    feat = _layernorm(h_new, params["lnr_g"], params["lnr_b"])
    values = jnp.dot(feat, params["wv"], precision=hp) + params["bv"]
    return values, h_new[:, None, :]


if __name__ == "__main__":
    B, OBS_DIM, HIDDEN = 8, 24, 32          # small demo shapes; recurrent_N = 1

    key = jax.random.PRNGKey(0)
    k_obs, k_h, k_p = jax.random.split(key, 3)

    share_obs = jax.random.normal(k_obs, (B, OBS_DIM), jnp.float32)
    rnn_states = jax.random.normal(k_h, (B, 1, HIDDEN), jnp.float32)
    masks = jnp.tile(jnp.array([[1.0], [0.0]], jnp.float32), (B // 2, 1))  # [B, 1]

    params = make_params(k_p, OBS_DIM, HIDDEN)
    packed = pack_params(params, OBS_DIM, HIDDEN)   # pack once, reuse every forward

    values, new_rnn_states = r_critic_forward(share_obs, rnn_states, masks, packed)
    jax.block_until_ready((values, new_rnn_states))

    # sanity-check against pure-JAX reference (tightened tolerance, all-f32 path)
    ref_values, ref_states = r_critic_reference(share_obs, rnn_states, masks, params)
    assert values.shape == (B, 1) and new_rnn_states.shape == (B, 1, HIDDEN)
    assert jnp.allclose(values, ref_values, rtol=2e-3, atol=2e-3)
    assert jnp.allclose(new_rnn_states, ref_states, rtol=2e-3, atol=2e-3)

    print("KERNEL_OK")
</pallas_src>

<mosaic_0001>
module attributes {stable_mosaic.version = 11 : i64} {
  func.func @r_critic_kernel(%arg0: i32, %arg1: memref<8x128xf32, #tpu.memory_space<vmem>>, %arg2: memref<8x128xf32, #tpu.memory_space<vmem>>, %arg3: memref<8x1xf32, #tpu.memory_space<vmem>>, %arg4: memref<256x128xf32, #tpu.memory_space<vmem>>, %arg5: memref<256x384xf32, #tpu.memory_space<vmem>>, %arg6: memref<16x384xf32, #tpu.memory_space<vmem>>, %arg7: memref<8x1xf32, #tpu.memory_space<vmem>>, %arg8: memref<8x128xf32, #tpu.memory_space<vmem>>) attributes {dimension_semantics = [#tpu.dimension_semantics<parallel>], iteration_bounds = array<i64: 1>, scalar_prefetch = 0 : i64, scratch_operands = 0 : i64, tpu.core_type = #tpu.core_type<tc>, window_params = [{transform_indices = @transform_0, window_bounds = array<i64: 8, 128>}, {transform_indices = @transform_1, window_bounds = array<i64: 8, 128>}, {transform_indices = @transform_2, window_bounds = array<i64: 8, 1>}, {pipeline_mode = #tpu.pipeline_mode<synchronous>, transform_indices = @transform_3, window_bounds = array<i64: 256, 128>}, {pipeline_mode = #tpu.pipeline_mode<synchronous>, transform_indices = @transform_4, window_bounds = array<i64: 256, 384>}, {pipeline_mode = #tpu.pipeline_mode<synchronous>, transform_indices = @transform_5, window_bounds = array<i64: 16, 384>}, {transform_indices = @transform_6, window_bounds = array<i64: 8, 1>}, {transform_indices = @transform_7, window_bounds = array<i64: 8, 128>}]} {
    %c0 = arith.constant 0 : index
    %c0_0 = arith.constant 0 : index
    %0 = vector.load %arg1[%c0, %c0_0] : memref<8x128xf32, #tpu.memory_space<vmem>>, vector<8x128xf32>
    %c0_1 = arith.constant 0 : index
    %c0_2 = arith.constant 0 : index
    %1 = vector.load %arg6[%c0_1, %c0_2] : memref<16x384xf32, #tpu.memory_space<vmem>>, vector<1x128xf32>
    %c1 = arith.constant 1 : index
    %c0_3 = arith.constant 0 : index
    %2 = vector.load %arg6[%c1, %c0_3] : memref<16x384xf32, #tpu.memory_space<vmem>>, vector<1x128xf32>
    %3 = tpu.iota {dimensions = array<i32: 1>} : vector<8x128xi32>
    %c24_i32 = arith.constant 24 : i32
    %4 = vector.broadcast %c24_i32 : i32 to vector<8x128xi32>
    %5 = arith.cmpi slt, %3, %4 : vector<8x128xi32>
    %6 = arith.extui %5 : vector<8x128xi1> to vector<8x128xi32>
    %7 = arith.sitofp %6 : vector<8x128xi32> to vector<8x128xf32>
    %cst = arith.constant dense<0.000000e+00> : vector<8xf32>
    %8 = vector.multi_reduction <add>, %0, %cst [1] : vector<8x128xf32> to vector<8xf32>
    %9 = vector.shape_cast %8 : vector<8xf32> to vector<8x1xf32>
    %cst_4 = arith.constant 0.0416666679 : f32
    %10 = vector.broadcast %cst_4 : f32 to vector<8x1xf32>
    %11 = arith.mulf %9, %10 : vector<8x1xf32>
    %12 = vector.broadcast %11 : vector<8x1xf32> to vector<8x128xf32>
    %13 = arith.subf %0, %12 : vector<8x128xf32>
    %14 = arith.mulf %13, %7 : vector<8x128xf32>
    %15 = arith.mulf %14, %14 : vector<8x128xf32>
    %cst_5 = arith.constant dense<0.000000e+00> : vector<8xf32>
    %16 = vector.multi_reduction <add>, %15, %cst_5 [1] : vector<8x128xf32> to vector<8xf32>
    %17 = vector.shape_cast %16 : vector<8xf32> to vector<8x1xf32>
    %cst_6 = arith.constant 0.0416666679 : f32
    %18 = vector.broadcast %cst_6 : f32 to vector<8x1xf32>
    %19 = arith.mulf %17, %18 : vector<8x1xf32>
    %cst_7 = arith.constant 9.99999974E-6 : f32
    %20 = vector.broadcast %cst_7 : f32 to vector<8x1xf32>
    %21 = arith.addf %19, %20 : vector<8x1xf32>
    %22 = math.rsqrt %21 : vector<8x1xf32>
    %23 = vector.broadcast %22 : vector<8x1xf32> to vector<8x128xf32>
    %24 = arith.mulf %14, %23 : vector<8x128xf32>
    %25 = vector.broadcast %1 : vector<1x128xf32> to vector<8x128xf32>
    %26 = arith.mulf %24, %25 : vector<8x128xf32>
    %27 = vector.broadcast %2 : vector<1x128xf32> to vector<8x128xf32>
    %28 = arith.addf %26, %27 : vector<8x128xf32>
    %c0_8 = arith.constant 0 : index
    %c0_9 = arith.constant 0 : index
    %29 = vector.load %arg4[%c0_8, %c0_9] : memref<256x128xf32, #tpu.memory_space<vmem>>, vector<128x128xf32>
    %cst_10 = arith.constant dense<0.000000e+00> : vector<8x128xf32>
    %30 = tpu.matmul %28, %29, %cst_10 {dimension_numbers = #tpu.dot_dimension_numbers<[1], [0], [0], [1], [0, 0, 1, 1], [], []>} : vector<8x128xf32>, vector<128x128xf32>, vector<8x128xf32> -> vector<8x128xf32>
    %c8 = arith.constant 8 : index
    %c0_11 = arith.constant 0 : index
    %31 = vector.load %arg6[%c8, %c0_11] : memref<16x384xf32, #tpu.memory_space<vmem>>, vector<1x128xf32>
    %32 = vector.broadcast %31 : vector<1x128xf32> to vector<8x128xf32>
    %33 = arith.addf %30, %32 : vector<8x128xf32>
    %cst_12 = arith.constant 0.000000e+00 : f32
    %34 = vector.broadcast %cst_12 : f32 to vector<8x128xf32>
    %35 = arith.maximumf %33, %34 : vector<8x128xf32>
    %c2 = arith.constant 2 : index
    %c0_13 = arith.constant 0 : index
    %36 = vector.load %arg6[%c2, %c0_13] : memref<16x384xf32, #tpu.memory_space<vmem>>, vector<1x128xf32>
    %c3 = arith.constant 3 : index
    %c0_14 = arith.constant 0 : index
    %37 = vector.load %arg6[%c3, %c0_14] : memref<16x384xf32, #tpu.memory_space<vmem>>, vector<1x128xf32>
    %38 = tpu.iota {dimensions = array<i32: 1>} : vector<8x128xi32>
    %c32_i32 = arith.constant 32 : i32
    %39 = vector.broadcast %c32_i32 : i32 to vector<8x128xi32>
    %40 = arith.cmpi slt, %38, %39 : vector<8x128xi32>
    %41 = arith.extui %40 : vector<8x128xi1> to vector<8x128xi32>
    %42 = arith.sitofp %41 : vector<8x128xi32> to vector<8x128xf32>
    %cst_15 = arith.constant dense<0.000000e+00> : vector<8xf32>
    %43 = vector.multi_reduction <add>, %35, %cst_15 [1] : vector<8x128xf32> to vector<8xf32>
    %44 = vector.shape_cast %43 : vector<8xf32> to vector<8x1xf32>
    %cst_16 = arith.constant 3.125000e-02 : f32
    %45 = vector.broadcast %cst_16 : f32 to vector<8x1xf32>
    %46 = arith.mulf %44, %45 : vector<8x1xf32>
    %47 = vector.broadcast %46 : vector<8x1xf32> to vector<8x128xf32>
    %48 = arith.subf %35, %47 : vector<8x128xf32>
    %49 = arith.mulf %48, %42 : vector<8x128xf32>
    %50 = arith.mulf %49, %49 : vector<8x128xf32>
    %cst_17 = arith.constant dense<0.000000e+00> : vector<8xf32>
    %51 = vector.multi_reduction <add>, %50, %cst_17 [1] : vector<8x128xf32> to vector<8xf32>
    %52 = vector.shape_cast %51 : vector<8xf32> to vector<8x1xf32>
    %cst_18 = arith.constant 3.125000e-02 : f32
    %53 = vector.broadcast %cst_18 : f32 to vector<8x1xf32>
    %54 = arith.mulf %52, %53 : vector<8x1xf32>
    %cst_19 = arith.constant 9.99999974E-6 : f32
    %55 = vector.broadcast %cst_19 : f32 to vector<8x1xf32>
    %56 = arith.addf %54, %55 : vector<8x1xf32>
    %57 = math.rsqrt %56 : vector<8x1xf32>
    %58 = vector.broadcast %57 : vector<8x1xf32> to vector<8x128xf32>
    %59 = arith.mulf %49, %58 : vector<8x128xf32>
    %60 = vector.broadcast %36 : vector<1x128xf32> to vector<8x128xf32>
    %61 = arith.mulf %59, %60 : vector<8x128xf32>
    %62 = vector.broadcast %37 : vector<1x128xf32> to vector<8x128xf32>
    %63 = arith.addf %61, %62 : vector<8x128xf32>
    %c128 = arith.constant 128 : index
    %c0_20 = arith.constant 0 : index
    %64 = vector.load %arg4[%c128, %c0_20] : memref<256x128xf32, #tpu.memory_space<vmem>>, vector<128x128xf32>
    %cst_21 = arith.constant dense<0.000000e+00> : vector<8x128xf32>
    %65 = tpu.matmul %63, %64, %cst_21 {dimension_numbers = #tpu.dot_dimension_numbers<[1], [0], [0], [1], [0, 0, 1, 1], [], []>} : vector<8x128xf32>, vector<128x128xf32>, vector<8x128xf32> -> vector<8x128xf32>
    %c9 = arith.constant 9 : index
    %c0_22 = arith.constant 0 : index
    %66 = vector.load %arg6[%c9, %c0_22] : memref<16x384xf32, #tpu.memory_space<vmem>>, vector<1x128xf32>
    %67 = vector.broadcast %66 : vector<1x128xf32> to vector<8x128xf32>
    %68 = arith.addf %65, %67 : vector<8x128xf32>
    %cst_23 = arith.constant 0.000000e+00 : f32
    %69 = vector.broadcast %cst_23 : f32 to vector<8x128xf32>
    %70 = arith.maximumf %68, %69 : vector<8x128xf32>
    %c4 = arith.constant 4 : index
    %c0_24 = arith.constant 0 : index
    %71 = vector.load %arg6[%c4, %c0_24] : memref<16x384xf32, #tpu.memory_space<vmem>>, vector<1x128xf32>
    %c5 = arith.constant 5 : index
    %c0_25 = arith.constant 0 : index
    %72 = vector.load %arg6[%c5, %c0_25] : memref<16x384xf32, #tpu.memory_space<vmem>>, vector<1x128xf32>
    %73 = tpu.iota {dimensions = array<i32: 1>} : vector<8x128xi32>
    %c32_i32_26 = arith.constant 32 : i32
    %74 = vector.broadcast %c32_i32_26 : i32 to vector<8x128xi32>
    %75 = arith.cmpi slt, %73, %74 : vector<8x128xi32>
    %76 = arith.extui %75 : vector<8x128xi1> to vector<8x128xi32>
    %77 = arith.sitofp %76 : vector<8x128xi32> to vector<8x128xf32>
    %cst_27 = arith.constant dense<0.000000e+00> : vector<8xf32>
    %78 = vector.multi_reduction <add>, %70, %cst_27 [1] : vector<8x128xf32> to vector<8xf32>
    %79 = vector.shape_cast %78 : vector<8xf32> to vector<8x1xf32>
    %cst_28 = arith.constant 3.125000e-02 : f32
    %80 = vector.broadcast %cst_28 : f32 to vector<8x1xf32>
    %81 = arith.mulf %79, %80 : vector<8x1xf32>
    %82 = vector.broadcast %81 : vector<8x1xf32> to vector<8x128xf32>
    %83 = arith.subf %70, %82 : vector<8x128xf32>
    %84 = arith.mulf %83, %77 : vector<8x128xf32>
    %85 = arith.mulf %84, %84 : vector<8x128xf32>
    %cst_29 = arith.constant dense<0.000000e+00> : vector<8xf32>
    %86 = vector.multi_reduction <add>, %85, %cst_29 [1] : vector<8x128xf32> to vector<8xf32>
    %87 = vector.shape_cast %86 : vector<8xf32> to vector<8x1xf32>
    %cst_30 = arith.constant 3.125000e-02 : f32
    %88 = vector.broadcast %cst_30 : f32 to vector<8x1xf32>
    %89 = arith.mulf %87, %88 : vector<8x1xf32>
    %cst_31 = arith.constant 9.99999974E-6 : f32
    %90 = vector.broadcast %cst_31 : f32 to vector<8x1xf32>
    %91 = arith.addf %89, %90 : vector<8x1xf32>
    %92 = math.rsqrt %91 : vector<8x1xf32>
    %93 = vector.broadcast %92 : vector<8x1xf32> to vector<8x128xf32>
    %94 = arith.mulf %84, %93 : vector<8x128xf32>
    %95 = vector.broadcast %71 : vector<1x128xf32> to vector<8x128xf32>
    %96 = arith.mulf %94, %95 : vector<8x128xf32>
    %97 = vector.broadcast %72 : vector<1x128xf32> to vector<8x128xf32>
    %98 = arith.addf %96, %97 : vector<8x128xf32>
    %c0_32 = arith.constant 0 : index
    %c0_33 = arith.constant 0 : index
    %99 = vector.load %arg2[%c0_32, %c0_33] : memref<8x128xf32, #tpu.memory_space<vmem>>, vector<8x128xf32>
    %c0_34 = arith.constant 0 : index
    %c0_35 = arith.constant 0 : index
    %100 = vector.load %arg3[%c0_34, %c0_35] : memref<8x1xf32, #tpu.memory_space<vmem>>, vector<8x1xf32>
    %101 = vector.broadcast %100 : vector<8x1xf32> to vector<8x128xf32>
    %102 = arith.mulf %99, %101 : vector<8x128xf32>
    %c0_36 = arith.constant 0 : index
    %c0_37 = arith.constant 0 : index
    %103 = vector.load %arg5[%c0_36, %c0_37] : memref<256x384xf32, #tpu.memory_space<vmem>>, vector<128x384xf32>
    %cst_38 = arith.constant dense<0.000000e+00> : vector<8x384xf32>
    %104 = tpu.matmul %98, %103, %cst_38 {dimension_numbers = #tpu.dot_dimension_numbers<[1], [0], [0], [1], [0, 0, 1, 1], [], []>} : vector<8x128xf32>, vector<128x384xf32>, vector<8x384xf32> -> vector<8x384xf32>
    %c10 = arith.constant 10 : index
    %c0_39 = arith.constant 0 : index
    %105 = vector.load %arg6[%c10, %c0_39] : memref<16x384xf32, #tpu.memory_space<vmem>>, vector<1x384xf32>
    %106 = vector.broadcast %105 : vector<1x384xf32> to vector<8x384xf32>
    %107 = arith.addf %104, %106 : vector<8x384xf32>
    %c128_40 = arith.constant 128 : index
    %c0_41 = arith.constant 0 : index
    %108 = vector.load %arg5[%c128_40, %c0_41] : memref<256x384xf32, #tpu.memory_space<vmem>>, vector<128x384xf32>
    %cst_42 = arith.constant dense<0.000000e+00> : vector<8x384xf32>
    %109 = tpu.matmul %102, %108, %cst_42 {dimension_numbers = #tpu.dot_dimension_numbers<[1], [0], [0], [1], [0, 0, 1, 1], [], []>} : vector<8x128xf32>, vector<128x384xf32>, vector<8x384xf32> -> vector<8x384xf32>
    %110 = vector.extract_strided_slice %107 {offsets = [0, 0], sizes = [8, 128], strides = [1, 1]} : vector<8x384xf32> to vector<8x128xf32>
    %111 = vector.extract_strided_slice %109 {offsets = [0, 0], sizes = [8, 128], strides = [1, 1]} : vector<8x384xf32> to vector<8x128xf32>
    %112 = arith.addf %110, %111 : vector<8x128xf32>
    %113 = arith.negf %112 : vector<8x128xf32>
    %114 = math.exp %113 : vector<8x128xf32>
    %cst_43 = arith.constant 1.000000e+00 : f32
    %115 = vector.broadcast %cst_43 : f32 to vector<8x128xf32>
    %116 = arith.addf %115, %114 : vector<8x128xf32>
    %117 = arith.divf %115, %116 : vector<8x128xf32>
    %118 = vector.extract_strided_slice %107 {offsets = [0, 128], sizes = [8, 128], strides = [1, 1]} : vector<8x384xf32> to vector<8x128xf32>
    %119 = vector.extract_strided_slice %109 {offsets = [0, 128], sizes = [8, 128], strides = [1, 1]} : vector<8x384xf32> to vector<8x128xf32>
    %120 = arith.addf %118, %119 : vector<8x128xf32>
    %121 = arith.negf %120 : vector<8x128xf32>
    %122 = math.exp %121 : vector<8x128xf32>
    %cst_44 = arith.constant 1.000000e+00 : f32
    %123 = vector.broadcast %cst_44 : f32 to vector<8x128xf32>
    %124 = arith.addf %123, %122 : vector<8x128xf32>
    %125 = arith.divf %123, %124 : vector<8x128xf32>
    %126 = vector.extract_strided_slice %107 {offsets = [0, 256], sizes = [8, 128], strides = [1, 1]} : vector<8x384xf32> to vector<8x128xf32>
    %127 = vector.extract_strided_slice %109 {offsets = [0, 256], sizes = [8, 128], strides = [1, 1]} : vector<8x384xf32> to vector<8x128xf32>
    %c11 = arith.constant 11 : index
    %c0_45 = arith.constant 0 : index
    %128 = vector.load %arg6[%c11, %c0_45] : memref<16x384xf32, #tpu.memory_space<vmem>>, vector<1x128xf32>
    %129 = vector.broadcast %128 : vector<1x128xf32> to vector<8x128xf32>
    %130 = arith.addf %127, %129 : vector<8x128xf32>
    %131 = arith.mulf %117, %130 : vector<8x128xf32>
    %132 = arith.addf %126, %131 : vector<8x128xf32>
    %133 = math.tanh %132 : vector<8x128xf32>
    %cst_46 = arith.constant 1.000000e+00 : f32
    %134 = vector.broadcast %cst_46 : f32 to vector<8x128xf32>
    %135 = arith.subf %134, %125 : vector<8x128xf32>
    %136 = arith.mulf %135, %133 : vector<8x128xf32>
    %137 = arith.mulf %125, %102 : vector<8x128xf32>
    %138 = arith.addf %136, %137 : vector<8x128xf32>
    %c0_47 = arith.constant 0 : index
    %c0_48 = arith.constant 0 : index
    %139 = vector.load %arg8[%c0_47, %c0_48] : memref<8x128xf32, #tpu.memory_space<vmem>>, vector<8x128xf32>
    tpu.vector_store %arg8[%c0_47, %c0_48], %138 {strides = array<i32>} : memref<8x128xf32, #tpu.memory_space<vmem>>, vector<8x128xf32>,
    %c6 = arith.constant 6 : index
    %c0_49 = arith.constant 0 : index
    %140 = vector.load %arg6[%c6, %c0_49] : memref<16x384xf32, #tpu.memory_space<vmem>>, vector<1x128xf32>
    %c7 = arith.constant 7 : index
    %c0_50 = arith.constant 0 : index
    %141 = vector.load %arg6[%c7, %c0_50] : memref<16x384xf32, #tpu.memory_space<vmem>>, vector<1x128xf32>
    %142 = tpu.iota {dimensions = array<i32: 1>} : vector<8x128xi32>
    %c32_i32_51 = arith.constant 32 : i32
    %143 = vector.broadcast %c32_i32_51 : i32 to vector<8x128xi32>
    %144 = arith.cmpi slt, %142, %143 : vector<8x128xi32>
    %145 = arith.extui %144 : vector<8x128xi1> to vector<8x128xi32>
    %146 = arith.sitofp %145 : vector<8x128xi32> to vector<8x128xf32>
    %cst_52 = arith.constant dense<0.000000e+00> : vector<8xf32>
    %147 = vector.multi_reduction <add>, %138, %cst_52 [1] : vector<8x128xf32> to vector<8xf32>
    %148 = vector.shape_cast %147 : vector<8xf32> to vector<8x1xf32>
    %cst_53 = arith.constant 3.125000e-02 : f32
    %149 = vector.broadcast %cst_53 : f32 to vector<8x1xf32>
    %150 = arith.mulf %148, %149 : vector<8x1xf32>
    %151 = vector.broadcast %150 : vector<8x1xf32> to vector<8x128xf32>
    %152 = arith.subf %138, %151 : vector<8x128xf32>
    %153 = arith.mulf %152, %146 : vector<8x128xf32>
    %154 = arith.mulf %153, %153 : vector<8x128xf32>
    %cst_54 = arith.constant dense<0.000000e+00> : vector<8xf32>
    %155 = vector.multi_reduction <add>, %154, %cst_54 [1] : vector<8x128xf32> to vector<8xf32>
    %156 = vector.shape_cast %155 : vector<8xf32> to vector<8x1xf32>
    %cst_55 = arith.constant 3.125000e-02 : f32
    %157 = vector.broadcast %cst_55 : f32 to vector<8x1xf32>
    %158 = arith.mulf %156, %157 : vector<8x1xf32>
    %cst_56 = arith.constant 9.99999974E-6 : f32
    %159 = vector.broadcast %cst_56 : f32 to vector<8x1xf32>
    %160 = arith.addf %158, %159 : vector<8x1xf32>
    %161 = math.rsqrt %160 : vector<8x1xf32>
    %162 = vector.broadcast %161 : vector<8x1xf32> to vector<8x128xf32>
    %163 = arith.mulf %153, %162 : vector<8x128xf32>
    %164 = vector.broadcast %140 : vector<1x128xf32> to vector<8x128xf32>
    %165 = arith.mulf %163, %164 : vector<8x128xf32>
    %166 = vector.broadcast %141 : vector<1x128xf32> to vector<8x128xf32>
    %167 = arith.addf %165, %166 : vector<8x128xf32>
    %c12 = arith.constant 12 : index
    %c0_57 = arith.constant 0 : index
    %168 = vector.load %arg6[%c12, %c0_57] : memref<16x384xf32, #tpu.memory_space<vmem>>, vector<1x128xf32>
    %169 = vector.broadcast %168 : vector<1x128xf32> to vector<8x128xf32>
    %170 = arith.mulf %167, %169 : vector<8x128xf32>
    %cst_58 = arith.constant dense<0.000000e+00> : vector<8xf32>
    %171 = vector.multi_reduction <add>, %170, %cst_58 [1] : vector<8x128xf32> to vector<8xf32>
    %172 = vector.shape_cast %171 : vector<8xf32> to vector<8x1xf32>
    %c13 = arith.constant 13 : index
    %c0_59 = arith.constant 0 : index
    %173 = vector.load %arg6[%c13, %c0_59] : memref<16x384xf32, #tpu.memory_space<vmem>>, vector<1x128xf32>
    %cst_60 = arith.constant dense<0.000000e+00> : vector<1xf32>
    %174 = vector.multi_reduction <add>, %173, %cst_60 [1] : vector<1x128xf32> to vector<1xf32>
    %175 = vector.shape_cast %174 : vector<1xf32> to vector<1x1xf32>
    %176 = vector.broadcast %175 : vector<1x1xf32> to vector<8x1xf32>
    %177 = arith.addf %172, %176 : vector<8x1xf32>
    %c0_61 = arith.constant 0 : index
    %c0_62 = arith.constant 0 : index
    %178 = vector.load %arg7[%c0_61, %c0_62] : memref<8x1xf32, #tpu.memory_space<vmem>>, vector<8x1xf32>
    tpu.vector_store %arg7[%c0_61, %c0_62], %177 {strides = array<i32>} : memref<8x1xf32, #tpu.memory_space<vmem>>, vector<8x1xf32>,
    return
  }
  func.func @transform_0(%arg0: i32) -> (i32, i32) {
    %c0_i32 = arith.constant 0 : i32
    %c0_i32_0 = arith.constant 0 : i32
    return %arg0, %c0_i32 : i32, i32
  }
  func.func @transform_1(%arg0: i32) -> (i32, i32) {
    %c0_i32 = arith.constant 0 : i32
    %c0_i32_0 = arith.constant 0 : i32
    return %arg0, %c0_i32 : i32, i32
  }
  func.func @transform_2(%arg0: i32) -> (i32, i32) {
    %c0_i32 = arith.constant 0 : i32
    %c0_i32_0 = arith.constant 0 : i32
    return %arg0, %c0_i32 : i32, i32
  }
  func.func @transform_3(%arg0: i32) -> (i32, i32) {
    %c0_i32 = arith.constant 0 : i32
    %c0_i32_0 = arith.constant 0 : i32
    %c0_i32_1 = arith.constant 0 : i32
    return %c0_i32, %c0_i32_0 : i32, i32
  }
  func.func @transform_4(%arg0: i32) -> (i32, i32) {
    %c0_i32 = arith.constant 0 : i32
    %c0_i32_0 = arith.constant 0 : i32
    %c0_i32_1 = arith.constant 0 : i32
    return %c0_i32, %c0_i32_0 : i32, i32
  }
  func.func @transform_5(%arg0: i32) -> (i32, i32) {
    %c0_i32 = arith.constant 0 : i32
    %c0_i32_0 = arith.constant 0 : i32
    %c0_i32_1 = arith.constant 0 : i32
    return %c0_i32, %c0_i32_0 : i32, i32
  }
  func.func @transform_6(%arg0: i32) -> (i32, i32) {
    %c0_i32 = arith.constant 0 : i32
    %c0_i32_0 = arith.constant 0 : i32
    return %arg0, %c0_i32 : i32, i32
  }
  func.func @transform_7(%arg0: i32) -> (i32, i32) {
    %c0_i32 = arith.constant 0 : i32
    %c0_i32_0 = arith.constant 0 : i32
    return %arg0, %c0_i32 : i32, i32
  }
}

</mosaic_0001>

<llo_original>
// kernel: tpu_custom_call.1
$region0: #{tpu_custom_call.1}
  #allocation0 [shape = 'u32[]', space=smem, size = 0x4, offset = 0x4, fixed_abs, tag = 'smem constant byte address 0x4 - core index']
  #allocation1 [shape = 'u32[144,128]{1,0:T(1,128)}', space=vmem, size = 0x12000, scoped, tag = 'internal scratch']
  %s0 = inlined_call_operand.vmem [shape: f32[8,128], index: 0, kind: input, shape index: {}]
  %s1 = inlined_call_operand.hbm [shape: f32[8,128], index: 1, kind: input, shape index: {}]
  %s2 = inlined_call_operand.vmem [shape: f32[8,1], index: 2, kind: input, shape index: {}]
  %s3 = inlined_call_operand.hbm [shape: f32[256,128], index: 3, kind: input, shape index: {}]
  %s4 = inlined_call_operand.hbm [shape: f32[256,384], index: 4, kind: input, shape index: {}]
  %s5 = inlined_call_operand.hbm [shape: f32[16,384], index: 5, kind: input, shape index: {}]
  %s6 = inlined_call_operand.vmem [shape: f32[8,1], index: 6, kind: output, shape index: {0}]
  %s7 = inlined_call_operand.hbm [shape: f32[8,128], index: 7, kind: output, shape index: {1}]
  %8 = xla_tuple %s6, %s7
  %s9 = sld [smem:[#allocation0]]
  $region58: #{tpu_custom_call.1} parent=0
    _
  %s11 = ssub.s32 1, %s9
  %s12 = scalar_select 0, %s11, %s9
  $region1: #{tpu_custom_call.1} parent=0
    #allocation2 [shape = 'u8[4096]{0}', space=vmem, size = 0x1000, scoped, tag = 'input window, operand 1, single buffered']
    #allocation3 [shape = 's32[1]{0}', space=sflag, size = 0x4, scoped, tag = 'scoped memory for tpu_custom_call.1']
    #allocation4 [shape = 's32[1]{0}', space=sflag, size = 0x4, scoped, tag = 'scoped memory for tpu_custom_call.1']
    #allocation5 [shape = 'u8[131072]{0}', space=vmem, size = 0x20000, scoped, tag = 'input window, operand 3, single buffered']
    #allocation6 [shape = 's32[1]{0}', space=sflag, size = 0x4, scoped, tag = 'scoped memory for tpu_custom_call.1']
    #allocation7 [shape = 'u8[393216]{0}', space=vmem, size = 0x60000, scoped, tag = 'input window, operand 4, single buffered']
    #allocation8 [shape = 'u8[24576]{0}', space=vmem, size = 0x6000, scoped, tag = 'input window, operand 5, single buffered']
    #allocation9 [shape = 's32[1]{0}', space=sflag, size = 0x4, scoped, tag = 'scoped memory for tpu_custom_call.1']
    #allocation10 [shape = 'u8[4096]{0}', space=vmem, size = 0x1000, scoped, tag = 'output window, operand 1, single buffered']
    %13 = vsyncpa [#allocation3], 0
    %14 = vsyncpa [#allocation6], 0
    %15 = vsyncpa [#allocation9], 0
    %16 = vsyncpa [#allocation4], 0
    // Predicated region
    $region2: #{tpu_custom_call.1} parent=1 // pred_check
      _
    $region3: #{tpu_custom_call.1} parent=1 // pred_check_branch
      %18 = sbr.rel (0) target = $region5
    $region4: #{tpu_custom_call.1} parent=1 // pred_region
      _
    $region5: #{tpu_custom_call.1} parent=1 // pred_fallthru
      _
    // Predicated region
    $region6: #{tpu_custom_call.1} parent=1 // pred_check
      _
    $region7: #{tpu_custom_call.1} parent=1 // pred_check_branch
      %20 = sbr.rel (0) target = $region9
    $region8: #{tpu_custom_call.1} parent=1 // pred_region
      %s22 = ssub.s32 128, 128
      %23 = vsyncadd [#allocation3], %s22
      %s25 = sshll.u32 [#allocation2], 4
      %s26 = int_to_ptr.vmem [resolvable:$true] %s25
      %28 = dma.hbm_to_vmem [thread:$0]  %s1, 128, %s26, [#allocation3]
    $region9: #{tpu_custom_call.1} parent=1 // pred_fallthru
      _
    // Predicated region
    $region10: #{tpu_custom_call.1} parent=1 // pred_check
      _
    $region11: #{tpu_custom_call.1} parent=1 // pred_check_branch
      %30 = sbr.rel (0) target = $region13
    $region12: #{tpu_custom_call.1} parent=1 // pred_region
      _
    $region13: #{tpu_custom_call.1} parent=1 // pred_fallthru
      _
    // Predicated region
    $region14: #{tpu_custom_call.1} parent=1 // pred_check
      _
    $region15: #{tpu_custom_call.1} parent=1 // pred_check_branch
      %32 = sbr.rel (0) target = $region17
    $region16: #{tpu_custom_call.1} parent=1 // pred_region
      %s34 = ssub.s32 4096, 4096
      %35 = vsyncadd [#allocation6], %s34
      %s36 = sshll.u32 [#allocation5], 4
      %s37 = int_to_ptr.vmem [resolvable:$true] %s36
      %42 = dma.hbm_to_vmem [thread:$0]  %s3, 4096, %s37, [#allocation6], 128, 128, 8
    $region17: #{tpu_custom_call.1} parent=1 // pred_fallthru
      _
    // Predicated region
    $region18: #{tpu_custom_call.1} parent=1 // pred_check
      _
    $region19: #{tpu_custom_call.1} parent=1 // pred_check_branch
      %44 = sbr.rel (0) target = $region21
    $region20: #{tpu_custom_call.1} parent=1 // pred_region
      %s46 = ssub.s32 12288, 12288
      %47 = vsyncadd [#allocation6], %s46
      %s48 = sshll.u32 [#allocation7], 4
      %s49 = int_to_ptr.vmem [resolvable:$true] %s48
      %54 = dma.hbm_to_vmem [thread:$0]  %s4, 12288, %s49, [#allocation6], 384, 384, 24
    $region21: #{tpu_custom_call.1} parent=1 // pred_fallthru
      _
    // Predicated region
    $region22: #{tpu_custom_call.1} parent=1 // pred_check
      _
    $region23: #{tpu_custom_call.1} parent=1 // pred_check_branch
      %56 = sbr.rel (0) target = $region25
    $region24: #{tpu_custom_call.1} parent=1 // pred_region
      %s58 = ssub.s32 768, 768
      %59 = vsyncadd [#allocation9], %s58
      %s60 = sshll.u32 [#allocation8], 4
      %s61 = int_to_ptr.vmem [resolvable:$true] %s60
      %66 = dma.hbm_to_vmem [thread:$0]  %s5, 768, %s61, [#allocation9], 384, 384, 24
    $region25: #{tpu_custom_call.1} parent=1 // pred_fallthru
      _
    // Predicated region
    $region26: #{tpu_custom_call.1} parent=1 // pred_check
      _
    $region27: #{tpu_custom_call.1} parent=1 // pred_check_branch
      %68 = sbr.rel (0) target = $region29
    $region28: #{tpu_custom_call.1} parent=1 // pred_region
      %69 = dma.done [#allocation3], 128
    $region29: #{tpu_custom_call.1} parent=1 // pred_fallthru
      _
    // Predicated region
    $region30: #{tpu_custom_call.1} parent=1 // pred_check
      _
    $region31: #{tpu_custom_call.1} parent=1 // pred_check_branch
      %71 = sbr.rel (0) target = $region33
    $region32: #{tpu_custom_call.1} parent=1 // pred_region
      %72 = dma.done [#allocation6], 4096
    $region33: #{tpu_custom_call.1} parent=1 // pred_fallthru
      _
    // Predicated region
    $region34: #{tpu_custom_call.1} parent=1 // pred_check
      _
    $region35: #{tpu_custom_call.1} parent=1 // pred_check_branch
      %74 = sbr.rel (0) target = $region37
    $region36: #{tpu_custom_call.1} parent=1 // pred_region
      %75 = dma.done [#allocation6], 12288
    $region37: #{tpu_custom_call.1} parent=1 // pred_fallthru
      _
    // Predicated region
    $region38: #{tpu_custom_call.1} parent=1 // pred_check
      _
    $region39: #{tpu_custom_call.1} parent=1 // pred_check_branch
      %77 = sbr.rel (0) target = $region41
    $region40: #{tpu_custom_call.1} parent=1 // pred_region
      %78 = dma.done [#allocation9], 768
    $region41: #{tpu_custom_call.1} parent=1 // pred_fallthru
      _
    %v79 = vld [vmem:[%s0] sm:$0xff]
    %v80 = vld [vmem:[#allocation8] ss:$0 sm:$0xff]
    %v81 = vld [vmem:[#allocation8 + $0x1] ss:$0 sm:$0xff]
    %v82 = vlaneseq
    %v83 = vand.u32 %v82, 127
    %vm84 = vcmp.lt.s32.totalorder %v83, 24
    %v85 = vsel %vm84, 1, 0
    %v86 = vcvt.s32.f32 %v85
    %87 = vadd.xlane.f32.xlu0 %v79
    %v88 = vpop.xlane.xlu0 %87
    %v89 = vmul.f32 %v88, 0.041666668
    %v90 = vsub.f32 %v79, %v89
    %v91 = vmul.f32 %v90, %v86
    %v92 = vmul.f32 %v91, %v91
    %93 = vadd.xlane.f32.xlu0 %v92
    %v94 = vpop.xlane.xlu0 %93
    %v95 = vmul.f32 %v94, 0.041666668
    %v96 = vadd.f32 %v95, 1e-05
    %v97 = vrsqrt.pop %v96
    %v98 = vmul.f32 %v91, %v97
    %v99 = vmul.f32 %v98, %v80
    %v100 = vadd.f32 %v99, %v81
    %v101 = vld [vmem:[#allocation5] sm:$0xff]
    %v102 = vld [vmem:[#allocation5 + $0x8] sm:$0xff]
    %v103 = vld [vmem:[#allocation5 + $0x10] sm:$0xff]
    %v104 = vld [vmem:[#allocation5 + $0x18] sm:$0xff]
    %v105 = vld [vmem:[#allocation5 + $0x20] sm:$0xff]
    %v106 = vld [vmem:[#allocation5 + $0x28] sm:$0xff]
    %v107 = vld [vmem:[#allocation5 + $0x30] sm:$0xff]
    %v108 = vld [vmem:[#allocation5 + $0x38] sm:$0xff]
    %v109 = vld [vmem:[#allocation5 + $0x40] sm:$0xff]
    %v110 = vld [vmem:[#allocation5 + $0x48] sm:$0xff]
    %v111 = vld [vmem:[#allocation5 + $0x50] sm:$0xff]
    %v112 = vld [vmem:[#allocation5 + $0x58] sm:$0xff]
    %v113 = vld [vmem:[#allocation5 + $0x60] sm:$0xff]
    %v114 = vld [vmem:[#allocation5 + $0x68] sm:$0xff]
    %v115 = vld [vmem:[#allocation5 + $0x70] sm:$0xff]
    %v116 = vld [vmem:[#allocation5 + $0x78] sm:$0xff]
    %v117 = vld [vmem:[#allocation8 + $0x18] ss:$0 sm:$0xff]
    %118 = vmatprep.subr.mxu0 0.0
    %119 = vmatpush1.msra.mxu0 %v116
    %120 = vmatprep.subr.mxu0 0.0
    %121 = vmatpush1.msra.mxu0 %v115
    %122 = vmatprep.subr.mxu0 0.0
    %123 = vmatpush1.msra.mxu0 %v114
    %124 = vmatprep.subr.mxu0 0.0
    %125 = vmatpush1.msra.mxu0 %v113
    %126 = vmatprep.subr.mxu0 0.0
    %127 = vmatpush1.msra.mxu0 %v112
    %128 = vmatprep.subr.mxu0 0.0
    %129 = vmatpush1.msra.mxu0 %v111
    %130 = vmatprep.subr.mxu0 0.0
    %131 = vmatpush1.msra.mxu0 %v110
    %132 = vmatprep.subr.mxu0 0.0
    %133 = vmatpush1.msra.mxu0 %v109
    %134 = vmatprep.subr.mxu0 0.0
    %135 = vmatpush1.msra.mxu0 %v108
    %136 = vmatprep.subr.mxu0 0.0
    %137 = vmatpush1.msra.mxu0 %v107
    %138 = vmatprep.subr.mxu0 0.0
    %139 = vmatpush1.msra.mxu0 %v106
    %140 = vmatprep.subr.mxu0 0.0
    %141 = vmatpush1.msra.mxu0 %v105
    %142 = vmatprep.subr.mxu0 0.0
    %143 = vmatpush1.msra.mxu0 %v104
    %144 = vmatprep.subr.mxu0 0.0
    %145 = vmatpush1.msra.mxu0 %v103
    %146 = vmatprep.subr.mxu0 0.0
    %147 = vmatpush1.msra.mxu0 %v102
    %148 = vmatprep.subr.mxu0 0.0
    %149 = vmatpush1.msra.mxu0 %v101
    %150 = vmatprep.subr.mxu0 0.0
    %151 = vmatpush2.msra.mxu0 0.0
    %152 = vmatprep.subr.mxu0 0.0
    %153 = vmatpush2.msra.mxu0 0.0
    %154 = vmatprep.subr.mxu0 0.0
    %155 = vmatpush2.msra.mxu0 0.0
    %156 = vmatprep.subr.mxu0 0.0
    %157 = vmatpush2.msra.mxu0 0.0
    %158 = vmatprep.subr.mxu0 0.0
    %159 = vmatpush2.msra.mxu0 0.0
    %160 = vmatprep.subr.mxu0 0.0
    %161 = vmatpush2.msra.mxu0 0.0
    %162 = vmatprep.subr.mxu0 0.0
    %163 = vmatpush2.msra.mxu0 0.0
    %164 = vmatprep.subr.mxu0 0.0
    %165 = vmatpush2.msra.mxu0 0.0
    %166 = vmatprep.subr.mxu0 0.0
    %167 = vmatpush2.msra.mxu0 0.0
    %168 = vmatprep.subr.mxu0 0.0
    %169 = vmatpush2.msra.mxu0 0.0
    %170 = vmatprep.subr.mxu0 0.0
    %171 = vmatpush2.msra.mxu0 0.0
    %172 = vmatprep.subr.mxu0 0.0
    %173 = vmatpush2.msra.mxu0 0.0
    %174 = vmatprep.subr.mxu0 0.0
    %175 = vmatpush2.msra.mxu0 0.0
    %176 = vmatprep.subr.mxu0 0.0
    %177 = vmatpush2.msra.mxu0 0.0
    %178 = vmatprep.subr.mxu0 0.0
    %179 = vmatpush2.msra.mxu0 0.0
    %180 = vmatprep.subr.mxu0 0.0
    %181 = vmatpush2.msra.mxu0 0.0
    %182 = vmatprep.mubr.f32.mxu0 0.0
    %183 = vmatmul.mubr.f32.gmra.mxu0 %v100
    %v184 = vpop.f32.mrf.mxu0
    %v185 = vadd.f32 %v117, %v184
    %v186 = vpop.f32.mrf.mxu0
    %187 = vdwg.mxu0
    %v188 = vmax.f32 %v185, 0.0
    %v189 = vld [vmem:[#allocation8 + $0x2] ss:$0 sm:$0xff]
    %v190 = vld [vmem:[#allocation8 + $0x3] ss:$0 sm:$0xff]
    %vm191 = vcmp.lt.s32.totalorder %v83, 32
    %v192 = vsel %vm191, 1, 0
    %v193 = vcvt.s32.f32 %v192
    %194 = vadd.xlane.f32.xlu0 %v188
    %v195 = vpop.xlane.xlu0 %194
    %v196 = vmul.f32 %v195, 0.03125
    %v197 = vsub.f32 %v188, %v196
    %v198 = vmul.f32 %v197, %v193
    %v199 = vmul.f32 %v198, %v198
    %200 = vadd.xlane.f32.xlu0 %v199
    %v201 = vpop.xlane.xlu0 %200
    %v202 = vmul.f32 %v201, 0.03125
    %v203 = vadd.f32 %v202, 1e-05
    %v204 = vrsqrt.pop %v203
    %v205 = vmul.f32 %v198, %v204
    %v206 = vmul.f32 %v205, %v189
    %v207 = vadd.f32 %v206, %v190
    %v208 = vld [vmem:[#allocation5 + $0x80] sm:$0xff]
    %v209 = vld [vmem:[#allocation5 + $0x88] sm:$0xff]
    %v210 = vld [vmem:[#allocation5 + $0x90] sm:$0xff]
    %v211 = vld [vmem:[#allocation5 + $0x98] sm:$0xff]
    %v212 = vld [vmem:[#allocation5 + $0xa0] sm:$0xff]
    %v213 = vld [vmem:[#allocation5 + $0xa8] sm:$0xff]
    %v214 = vld [vmem:[#allocation5 + $0xb0] sm:$0xff]
    %v215 = vld [vmem:[#allocation5 + $0xb8] sm:$0xff]
    %v216 = vld [vmem:[#allocation5 + $0xc0] sm:$0xff]
    %v217 = vld [vmem:[#allocation5 + $0xc8] sm:$0xff]
    %v218 = vld [vmem:[#allocation5 + $0xd0] sm:$0xff]
    %v219 = vld [vmem:[#allocation5 + $0xd8] sm:$0xff]
    %v220 = vld [vmem:[#allocation5 + $0xe0] sm:$0xff]
    %v221 = vld [vmem:[#allocation5 + $0xe8] sm:$0xff]
    %v222 = vld [vmem:[#allocation5 + $0xf0] sm:$0xff]
    %v223 = vld [vmem:[#allocation5 + $0xf8] sm:$0xff]
    %v224 = vld [vmem:[#allocation8 + $0x19] ss:$0 sm:$0xff]
    %225 = vmatprep.subr.mxu0 0.0
    %226 = vmatpush1.msra.mxu0 %v223
    %227 = vmatprep.subr.mxu0 0.0
    %228 = vmatpush1.msra.mxu0 %v222
    %229 = vmatprep.subr.mxu0 0.0
    %230 = vmatpush1.msra.mxu0 %v221
    %231 = vmatprep.subr.mxu0 0.0
    %232 = vmatpush1.msra.mxu0 %v220
    %233 = vmatprep.subr.mxu0 0.0
    %234 = vmatpush1.msra.mxu0 %v219
    %235 = vmatprep.subr.mxu0 0.0
    %236 = vmatpush1.msra.mxu0 %v218
    %237 = vmatprep.subr.mxu0 0.0
    %238 = vmatpush1.msra.mxu0 %v217
    %239 = vmatprep.subr.mxu0 0.0
    %240 = vmatpush1.msra.mxu0 %v216
    %241 = vmatprep.subr.mxu0 0.0
    %242 = vmatpush1.msra.mxu0 %v215
    %243 = vmatprep.subr.mxu0 0.0
    %244 = vmatpush1.msra.mxu0 %v214
    %245 = vmatprep.subr.mxu0 0.0
    %246 = vmatpush1.msra.mxu0 %v213
    %247 = vmatprep.subr.mxu0 0.0
    %248 = vmatpush1.msra.mxu0 %v212
    %249 = vmatprep.subr.mxu0 0.0
    %250 = vmatpush1.msra.mxu0 %v211
    %251 = vmatprep.subr.mxu0 0.0
    %252 = vmatpush1.msra.mxu0 %v210
    %253 = vmatprep.subr.mxu0 0.0
    %254 = vmatpush1.msra.mxu0 %v209
    %255 = vmatprep.subr.mxu0 0.0
    %256 = vmatpush1.msra.mxu0 %v208
    %257 = vmatprep.subr.mxu0 0.0
    %258 = vmatpush2.msra.mxu0 0.0
    %259 = vmatprep.subr.mxu0 0.0
    %260 = vmatpush2.msra.mxu0 0.0
    %261 = vmatprep.subr.mxu0 0.0
    %262 = vmatpush2.msra.mxu0 0.0
    %263 = vmatprep.subr.mxu0 0.0
    %264 = vmatpush2.msra.mxu0 0.0
    %265 = vmatprep.subr.mxu0 0.0
    %266 = vmatpush2.msra.mxu0 0.0
    %267 = vmatprep.subr.mxu0 0.0
    %268 = vmatpush2.msra.mxu0 0.0
    %269 = vmatprep.subr.mxu0 0.0
    %270 = vmatpush2.msra.mxu0 0.0
    %271 = vmatprep.subr.mxu0 0.0
    %272 = vmatpush2.msra.mxu0 0.0
    %273 = vmatprep.subr.mxu0 0.0
    %274 = vmatpush2.msra.mxu0 0.0
    %275 = vmatprep.subr.mxu0 0.0
    %276 = vmatpush2.msra.mxu0 0.0
    %277 = vmatprep.subr.mxu0 0.0
    %278 = vmatpush2.msra.mxu0 0.0
    %279 = vmatprep.subr.mxu0 0.0
    %280 = vmatpush2.msra.mxu0 0.0
    %281 = vmatprep.subr.mxu0 0.0
    %282 = vmatpush2.msra.mxu0 0.0
    %283 = vmatprep.subr.mxu0 0.0
    %284 = vmatpush2.msra.mxu0 0.0
    %285 = vmatprep.subr.mxu0 0.0
    %286 = vmatpush2.msra.mxu0 0.0
    %287 = vmatprep.subr.mxu0 0.0
    %288 = vmatpush2.msra.mxu0 0.0
    %289 = vmatprep.mubr.f32.mxu0 0.0
    %290 = vmatmul.mubr.f32.gmra.mxu0 %v207
    %v291 = vpop.f32.mrf.mxu0
    %v292 = vadd.f32 %v224, %v291
    %v293 = vpop.f32.mrf.mxu0
    %294 = vdwg.mxu0
    %v295 = vmax.f32 %v292, 0.0
    %v296 = vld [vmem:[#allocation8 + $0x4] ss:$0 sm:$0xff]
    %v297 = vld [vmem:[#allocation8 + $0x5] ss:$0 sm:$0xff]
    %298 = vadd.xlane.f32.xlu0 %v295
    %v299 = vpop.xlane.xlu0 %298
    %v300 = vmul.f32 %v299, 0.03125
    %v301 = vsub.f32 %v295, %v300
    %v302 = vmul.f32 %v301, %v193
    %v303 = vmul.f32 %v302, %v302
    %304 = vadd.xlane.f32.xlu0 %v303
    %v305 = vpop.xlane.xlu0 %304
    %v306 = vmul.f32 %v305, 0.03125
    %v307 = vadd.f32 %v306, 1e-05
    %v308 = vrsqrt.pop %v307
    %v309 = vmul.f32 %v302, %v308
    %v310 = vmul.f32 %v309, %v296
    %v311 = vadd.f32 %v310, %v297
    %v312 = vld [vmem:[#allocation2] sm:$0xff]
    %v313 = vld [vmem:[%s2] sm:$0xff]
    %315 = vset.pattern.permute.xlu0 0
    %316 = vperm.xlu0 %315, %v313
    %v317 = vpop.permute.xlu0 %316
    %v319 = vmul.f32 %v312, %v317
    %v320 = vld [vmem:[#allocation7] sm:$0xff]
    %v321 = vld [vmem:[#allocation7 + $0x8] sm:$0xff]
    %v322 = vld [vmem:[#allocation7 + $0x10] sm:$0xff]
    %v323 = vld [vmem:[#allocation7 + $0x18] sm:$0xff]
    %v324 = vld [vmem:[#allocation7 + $0x20] sm:$0xff]
    %v325 = vld [vmem:[#allocation7 + $0x28] sm:$0xff]
    %v326 = vld [vmem:[#allocation7 + $0x30] sm:$0xff]
    %v327 = vld [vmem:[#allocation7 + $0x38] sm:$0xff]
    %v328 = vld [vmem:[#allocation7 + $0x40] sm:$0xff]
    %v329 = vld [vmem:[#allocation7 + $0x48] sm:$0xff]
    %v330 = vld [vmem:[#allocation7 + $0x50] sm:$0xff]
    %v331 = vld [vmem:[#allocation7 + $0x58] sm:$0xff]
    %v332 = vld [vmem:[#allocation7 + $0x60] sm:$0xff]
    %v333 = vld [vmem:[#allocation7 + $0x68] sm:$0xff]
    %v334 = vld [vmem:[#allocation7 + $0x70] sm:$0xff]
    %v335 = vld [vmem:[#allocation7 + $0x78] sm:$0xff]
    %v336 = vld [vmem:[#allocation7 + $0x80] sm:$0xff]
    %v337 = vld [vmem:[#allocation7 + $0x88] sm:$0xff]
    %v338 = vld [vmem:[#allocation7 + $0x90] sm:$0xff]
    %v339 = vld [vmem:[#allocation7 + $0x98] sm:$0xff]
    %v340 = vld [vmem:[#allocation7 + $0xa0] sm:$0xff]
    %v341 = vld [vmem:[#allocation7 + $0xa8] sm:$0xff]
    %v342 = vld [vmem:[#allocation7 + $0xb0] sm:$0xff]
    %v343 = vld [vmem:[#allocation7 + $0xb8] sm:$0xff]
    %v344 = vld [vmem:[#allocation7 + $0xc0] sm:$0xff]
    %v345 = vld [vmem:[#allocation7 + $0xc8] sm:$0xff]
    %v346 = vld [vmem:[#allocation7 + $0xd0] sm:$0xff]
    %v347 = vld [vmem:[#allocation7 + $0xd8] sm:$0xff]
    %v348 = vld [vmem:[#allocation7 + $0xe0] sm:$0xff]
    %v349 = vld [vmem:[#allocation7 + $0xe8] sm:$0xff]
    %v350 = vld [vmem:[#allocation7 + $0xf0] sm:$0xff]
    %v351 = vld [vmem:[#allocation7 + $0xf8] sm:$0xff]
    %v352 = vld [vmem:[#allocation7 + $0x100] sm:$0xff]
    %v353 = vld [vmem:[#allocation7 + $0x108] sm:$0xff]
    %v354 = vld [vmem:[#allocation7 + $0x110] sm:$0xff]
    %v355 = vld [vmem:[#allocation7 + $0x118] sm:$0xff]
    %v356 = vld [vmem:[#allocation7 + $0x120] sm:$0xff]
    %v357 = vld [vmem:[#allocation7 + $0x128] sm:$0xff]
    %v358 = vld [vmem:[#allocation7 + $0x130] sm:$0xff]
    %v359 = vld [vmem:[#allocation7 + $0x138] sm:$0xff]
    %v360 = vld [vmem:[#allocation7 + $0x140] sm:$0xff]
    %v361 = vld [vmem:[#allocation7 + $0x148] sm:$0xff]
    %v362 = vld [vmem:[#allocation7 + $0x150] sm:$0xff]
    %v363 = vld [vmem:[#allocation7 + $0x158] sm:$0xff]
    %v364 = vld [vmem:[#allocation7 + $0x160] sm:$0xff]
    %v365 = vld [vmem:[#allocation7 + $0x168] sm:$0xff]
    %v366 = vld [vmem:[#allocation7 + $0x170] sm:$0xff]
    %v367 = vld [vmem:[#allocation7 + $0x178] sm:$0xff]
    %s368 = scalar_lea.vmem [#allocation8], 26
    %v369 = vld [vmem:[%s368] ss:$8 sm:$0x7]
    %v371 = vlaneseq
    %v372 = vshrl.u32 %v371, 7
    %v373 = vsub.s32 0, %v372
    %v374 = vrot.slane %v369, %v373
    %v375 = vlaneseq
    %v376 = vshrl.u32 %v375, 7
    %v377 = vsub.s32 1, %v376
    %v378 = vrot.slane %v369, %v377
    %v379 = vlaneseq
    %v380 = vshrl.u32 %v379, 7
    %v381 = vsub.s32 2, %v380
    %v382 = vrot.slane %v369, %v381
    %386 = vmatprep.subr.mxu0 %v366
    %387 = vmatpush1.msra.mxu0 %v365
    %388 = vmatprep.subr.mxu0 %v363
    %389 = vmatpush1.msra.mxu0 %v362
    %390 = vmatprep.subr.mxu0 %v360
    %391 = vmatpush1.msra.mxu0 %v359
    %392 = vmatprep.subr.mxu0 %v357
    %393 = vmatpush1.msra.mxu0 %v356
    %394 = vmatprep.subr.mxu0 %v354
    %395 = vmatpush1.msra.mxu0 %v353
    %396 = vmatprep.subr.mxu0 %v351
    %397 = vmatpush1.msra.mxu0 %v350
    %398 = vmatprep.subr.mxu0 %v348
    %399 = vmatpush1.msra.mxu0 %v347
    %400 = vmatprep.subr.mxu0 %v345
    %401 = vmatpush1.msra.mxu0 %v344
    %402 = vmatprep.subr.mxu0 %v342
    %403 = vmatpush1.msra.mxu0 %v341
    %404 = vmatprep.subr.mxu0 %v339
    %405 = vmatpush1.msra.mxu0 %v338
    %406 = vmatprep.subr.mxu0 %v336
    %407 = vmatpush1.msra.mxu0 %v335
    %408 = vmatprep.subr.mxu0 %v333
    %409 = vmatpush1.msra.mxu0 %v332
    %410 = vmatprep.subr.mxu0 %v330
    %411 = vmatpush1.msra.mxu0 %v329
    %412 = vmatprep.subr.mxu0 %v327
    %413 = vmatpush1.msra.mxu0 %v326
    %414 = vmatprep.subr.mxu0 %v324
    %415 = vmatpush1.msra.mxu0 %v323
    %416 = vmatprep.subr.mxu0 %v321
    %417 = vmatpush1.msra.mxu0 %v320
    %418 = vmatprep.subr.mxu0 0.0
    %419 = vmatpush2.msra.mxu0 0.0
    %420 = vmatprep.subr.mxu0 0.0
    %421 = vmatpush2.msra.mxu0 0.0
    %422 = vmatprep.subr.mxu0 0.0
    %423 = vmatpush2.msra.mxu0 0.0
    %424 = vmatprep.subr.mxu0 0.0
    %425 = vmatpush2.msra.mxu0 0.0
    %426 = vmatprep.subr.mxu0 0.0
    %427 = vmatpush2.msra.mxu0 0.0
    %428 = vmatprep.subr.mxu0 0.0
    %429 = vmatpush2.msra.mxu0 0.0
    %430 = vmatprep.subr.mxu0 0.0
    %431 = vmatpush2.msra.mxu0 0.0
    %432 = vmatprep.subr.mxu0 0.0
    %433 = vmatpush2.msra.mxu0 0.0
    %434 = vmatprep.subr.mxu0 0.0
    %435 = vmatpush2.msra.mxu0 0.0
    %436 = vmatprep.subr.mxu0 0.0
    %437 = vmatpush2.msra.mxu0 0.0
    %438 = vmatprep.subr.mxu0 0.0
    %439 = vmatpush2.msra.mxu0 0.0
    %440 = vmatprep.subr.mxu0 0.0
    %441 = vmatpush2.msra.mxu0 0.0
    %442 = vmatprep.subr.mxu0 0.0
    %443 = vmatpush2.msra.mxu0 0.0
    %444 = vmatprep.subr.mxu0 0.0
    %445 = vmatpush2.msra.mxu0 0.0
    %446 = vmatprep.subr.mxu0 0.0
    %447 = vmatpush2.msra.mxu0 0.0
    %448 = vmatprep.subr.mxu0 0.0
    %449 = vmatpush2.msra.mxu0 0.0
    %450 = vmatprep.mubr.f32.mxu0 0.0
    %451 = vmatmul.mubr.f32.gmra.mxu0 %v311
    %v452 = vpop.f32.mrf.mxu0
    %v453 = vadd.f32 %v374, %v452
    %v454 = vpop.f32.mrf.mxu0
    %v455 = vadd.f32 %v378, %v454
    %456 = vdwg.mxu0
    %457 = vmatprep.subr.mxu0 0.0
    %458 = vmatpush1.msra.mxu0 %v367
    %459 = vmatprep.subr.mxu0 0.0
    %460 = vmatpush1.msra.mxu0 %v364
    %461 = vmatprep.subr.mxu0 0.0
    %462 = vmatpush1.msra.mxu0 %v361
    %463 = vmatprep.subr.mxu0 0.0
    %464 = vmatpush1.msra.mxu0 %v358
    %465 = vmatprep.subr.mxu0 0.0
    %466 = vmatpush1.msra.mxu0 %v355
    %467 = vmatprep.subr.mxu0 0.0
    %468 = vmatpush1.msra.mxu0 %v352
    %469 = vmatprep.subr.mxu0 0.0
    %470 = vmatpush1.msra.mxu0 %v349
    %471 = vmatprep.subr.mxu0 0.0
    %472 = vmatpush1.msra.mxu0 %v346
    %473 = vmatprep.subr.mxu0 0.0
    %474 = vmatpush1.msra.mxu0 %v343
    %475 = vmatprep.subr.mxu0 0.0
    %476 = vmatpush1.msra.mxu0 %v340
    %477 = vmatprep.subr.mxu0 0.0
    %478 = vmatpush1.msra.mxu0 %v337
    %479 = vmatprep.subr.mxu0 0.0
    %480 = vmatpush1.msra.mxu0 %v334
    %481 = vmatprep.subr.mxu0 0.0
    %482 = vmatpush1.msra.mxu0 %v331
    %483 = vmatprep.subr.mxu0 0.0
    %484 = vmatpush1.msra.mxu0 %v328
    %485 = vmatprep.subr.mxu0 0.0
    %486 = vmatpush1.msra.mxu0 %v325
    %487 = vmatprep.subr.mxu0 0.0
    %488 = vmatpush1.msra.mxu0 %v322
    %489 = vmatprep.subr.mxu0 0.0
    %490 = vmatpush2.msra.mxu0 0.0
    %491 = vmatprep.subr.mxu0 0.0
    %492 = vmatpush2.msra.mxu0 0.0
    %493 = vmatprep.subr.mxu0 0.0
    %494 = vmatpush2.msra.mxu0 0.0
    %495 = vmatprep.subr.mxu0 0.0
    %496 = vmatpush2.msra.mxu0 0.0
    %497 = vmatprep.subr.mxu0 0.0
    %498 = vmatpush2.msra.mxu0 0.0
    %499 = vmatprep.subr.mxu0 0.0
    %500 = vmatpush2.msra.mxu0 0.0
    %501 = vmatprep.subr.mxu0 0.0
    %502 = vmatpush2.msra.mxu0 0.0
    %503 = vmatprep.subr.mxu0 0.0
    %504 = vmatpush2.msra.mxu0 0.0
    %505 = vmatprep.subr.mxu0 0.0
    %506 = vmatpush2.msra.mxu0 0.0
    %507 = vmatprep.subr.mxu0 0.0
    %508 = vmatpush2.msra.mxu0 0.0
    %509 = vmatprep.subr.mxu0 0.0
    %510 = vmatpush2.msra.mxu0 0.0
    %511 = vmatprep.subr.mxu0 0.0
    %512 = vmatpush2.msra.mxu0 0.0
    %513 = vmatprep.subr.mxu0 0.0
    %514 = vmatpush2.msra.mxu0 0.0
    %515 = vmatprep.subr.mxu0 0.0
    %516 = vmatpush2.msra.mxu0 0.0
    %517 = vmatprep.subr.mxu0 0.0
    %518 = vmatpush2.msra.mxu0 0.0
    %519 = vmatprep.subr.mxu0 0.0
    %520 = vmatpush2.msra.mxu0 0.0
    %521 = vmatprep.mubr.f32.mxu0 0.0
    %522 = vmatmul.mubr.f32.gmra.mxu0 %v311
    %v523 = vpop.f32.mrf.mxu0
    %v524 = vadd.f32 %v382, %v523
    %v525 = vpop.f32.mrf.mxu0
    %526 = vdwg.mxu0
    %v527 = vld [vmem:[#allocation7 + $0x180] sm:$0xff]
    %v528 = vld [vmem:[#allocation7 + $0x188] sm:$0xff]
    %v529 = vld [vmem:[#allocation7 + $0x190] sm:$0xff]
    %v530 = vld [vmem:[#allocation7 + $0x198] sm:$0xff]
    %v531 = vld [vmem:[#allocation7 + $0x1a0] sm:$0xff]
    %v532 = vld [vmem:[#allocation7 + $0x1a8] sm:$0xff]
    %v533 = vld [vmem:[#allocation7 + $0x1b0] sm:$0xff]
    %v534 = vld [vmem:[#allocation7 + $0x1b8] sm:$0xff]
    %v535 = vld [vmem:[#allocation7 + $0x1c0] sm:$0xff]
    %v536 = vld [vmem:[#allocation7 + $0x1c8] sm:$0xff]
    %v537 = vld [vmem:[#allocation7 + $0x1d0] sm:$0xff]
    %v538 = vld [vmem:[#allocation7 + $0x1d8] sm:$0xff]
    %v539 = vld [vmem:[#allocation7 + $0x1e0] sm:$0xff]
    %v540 = vld [vmem:[#allocation7 + $0x1e8] sm:$0xff]
    %v541 = vld [vmem:[#allocation7 + $0x1f0] sm:$0xff]
    %v542 = vld [vmem:[#allocation7 + $0x1f8] sm:$0xff]
    %v543 = vld [vmem:[#allocation7 + $0x200] sm:$0xff]
    %v544 = vld [vmem:[#allocation7 + $0x208] sm:$0xff]
    %v545 = vld [vmem:[#allocation7 + $0x210] sm:$0xff]
    %v546 = vld [vmem:[#allocation7 + $0x218] sm:$0xff]
    %v547 = vld [vmem:[#allocation7 + $0x220] sm:$0xff]
    %v548 = vld [vmem:[#allocation7 + $0x228] sm:$0xff]
    %v549 = vld [vmem:[#allocation7 + $0x230] sm:$0xff]
    %v550 = vld [vmem:[#allocation7 + $0x238] sm:$0xff]
    %v551 = vld [vmem:[#allocation7 + $0x240] sm:$0xff]
    %v552 = vld [vmem:[#allocation7 + $0x248] sm:$0xff]
    %v553 = vld [vmem:[#allocation7 + $0x250] sm:$0xff]
    %v554 = vld [vmem:[#allocation7 + $0x258] sm:$0xff]
    %v555 = vld [vmem:[#allocation7 + $0x260] sm:$0xff]
    %v556 = vld [vmem:[#allocation7 + $0x268] sm:$0xff]
    %v557 = vld [vmem:[#allocation7 + $0x270] sm:$0xff]
    %v558 = vld [vmem:[#allocation7 + $0x278] sm:$0xff]
    %v559 = vld [vmem:[#allocation7 + $0x280] sm:$0xff]
    %v560 = vld [vmem:[#allocation7 + $0x288] sm:$0xff]
    %v561 = vld [vmem:[#allocation7 + $0x290] sm:$0xff]
    %v562 = vld [vmem:[#allocation7 + $0x298] sm:$0xff]
    %v563 = vld [vmem:[#allocation7 + $0x2a0] sm:$0xff]
    %v564 = vld [vmem:[#allocation7 + $0x2a8] sm:$0xff]
    %v565 = vld [vmem:[#allocation7 + $0x2b0] sm:$0xff]
    %v566 = vld [vmem:[#allocation7 + $0x2b8] sm:$0xff]
    %v567 = vld [vmem:[#allocation7 + $0x2c0] sm:$0xff]
    %v568 = vld [vmem:[#allocation7 + $0x2c8] sm:$0xff]
    %v569 = vld [vmem:[#allocation7 + $0x2d0] sm:$0xff]
    %v570 = vld [vmem:[#allocation7 + $0x2d8] sm:$0xff]
    %v571 = vld [vmem:[#allocation7 + $0x2e0] sm:$0xff]
    %v572 = vld [vmem:[#allocation7 + $0x2e8] sm:$0xff]
    %v573 = vld [vmem:[#allocation7 + $0x2f0] sm:$0xff]
    %v574 = vld [vmem:[#allocation7 + $0x2f8] sm:$0xff]
    %575 = vmatprep.subr.mxu0 %v573
    %576 = vmatpush1.msra.mxu0 %v572
    %577 = vmatprep.subr.mxu0 %v570
    %578 = vmatpush1.msra.mxu0 %v569
    %579 = vmatprep.subr.mxu0 %v567
    %580 = vmatpush1.msra.mxu0 %v566
    %581 = vmatprep.subr.mxu0 %v564
    %582 = vmatpush1.msra.mxu0 %v563
    %583 = vmatprep.subr.mxu0 %v561
    %584 = vmatpush1.msra.mxu0 %v560
    %585 = vmatprep.subr.mxu0 %v558
    %586 = vmatpush1.msra.mxu0 %v557
    %587 = vmatprep.subr.mxu0 %v555
    %588 = vmatpush1.msra.mxu0 %v554
    %589 = vmatprep.subr.mxu0 %v552
    %590 = vmatpush1.msra.mxu0 %v551
    %591 = vmatprep.subr.mxu0 %v549
    %592 = vmatpush1.msra.mxu0 %v548
    %593 = vmatprep.subr.mxu0 %v546
    %594 = vmatpush1.msra.mxu0 %v545
    %595 = vmatprep.subr.mxu0 %v543
    %596 = vmatpush1.msra.mxu0 %v542
    %597 = vmatprep.subr.mxu0 %v540
    %598 = vmatpush1.msra.mxu0 %v539
    %599 = vmatprep.subr.mxu0 %v537
    %600 = vmatpush1.msra.mxu0 %v536
    %601 = vmatprep.subr.mxu0 %v534
    %602 = vmatpush1.msra.mxu0 %v533
    %603 = vmatprep.subr.mxu0 %v531
    %604 = vmatpush1.msra.mxu0 %v530
    %605 = vmatprep.subr.mxu0 %v528
    %606 = vmatpush1.msra.mxu0 %v527
    %607 = vmatprep.subr.mxu0 0.0
    %608 = vmatpush2.msra.mxu0 0.0
    %609 = vmatprep.subr.mxu0 0.0
    %610 = vmatpush2.msra.mxu0 0.0
    %611 = vmatprep.subr.mxu0 0.0
    %612 = vmatpush2.msra.mxu0 0.0
    %613 = vmatprep.subr.mxu0 0.0
    %614 = vmatpush2.msra.mxu0 0.0
    %615 = vmatprep.subr.mxu0 0.0
    %616 = vmatpush2.msra.mxu0 0.0
    %617 = vmatprep.subr.mxu0 0.0
    %618 = vmatpush2.msra.mxu0 0.0
    %619 = vmatprep.subr.mxu0 0.0
    %620 = vmatpush2.msra.mxu0 0.0
    %621 = vmatprep.subr.mxu0 0.0
    %622 = vmatpush2.msra.mxu0 0.0
    %623 = vmatprep.subr.mxu0 0.0
    %624 = vmatpush2.msra.mxu0 0.0
    %625 = vmatprep.subr.mxu0 0.0
    %626 = vmatpush2.msra.mxu0 0.0
    %627 = vmatprep.subr.mxu0 0.0
    %628 = vmatpush2.msra.mxu0 0.0
    %629 = vmatprep.subr.mxu0 0.0
    %630 = vmatpush2.msra.mxu0 0.0
    %631 = vmatprep.subr.mxu0 0.0
    %632 = vmatpush2.msra.mxu0 0.0
    %633 = vmatprep.subr.mxu0 0.0
    %634 = vmatpush2.msra.mxu0 0.0
    %635 = vmatprep.subr.mxu0 0.0
    %636 = vmatpush2.msra.mxu0 0.0
    %637 = vmatprep.subr.mxu0 0.0
    %638 = vmatpush2.msra.mxu0 0.0
    %639 = vmatprep.mubr.f32.mxu0 0.0
    %640 = vmatmul.mubr.f32.gmra.mxu0 %v319
    %v641 = vpop.f32.mrf.mxu0
    %v642 = vadd.f32 0.0, %v641
    %v643 = vpop.f32.mrf.mxu0
    %v644 = vadd.f32 0.0, %v643
    %645 = vdwg.mxu0
    %646 = vmatprep.subr.mxu0 0.0
    %647 = vmatpush1.msra.mxu0 %v574
    %648 = vmatprep.subr.mxu0 0.0
    %649 = vmatpush1.msra.mxu0 %v571
    %650 = vmatprep.subr.mxu0 0.0
    %651 = vmatpush1.msra.mxu0 %v568
    %652 = vmatprep.subr.mxu0 0.0
    %653 = vmatpush1.msra.mxu0 %v565
    %654 = vmatprep.subr.mxu0 0.0
    %655 = vmatpush1.msra.mxu0 %v562
    %656 = vmatprep.subr.mxu0 0.0
    %657 = vmatpush1.msra.mxu0 %v559
    %658 = vmatprep.subr.mxu0 0.0
    %659 = vmatpush1.msra.mxu0 %v556
    %660 = vmatprep.subr.mxu0 0.0
    %661 = vmatpush1.msra.mxu0 %v553
    %662 = vmatprep.subr.mxu0 0.0
    %663 = vmatpush1.msra.mxu0 %v550
    %664 = vmatprep.subr.mxu0 0.0
    %665 = vmatpush1.msra.mxu0 %v547
    %666 = vmatprep.subr.mxu0 0.0
    %667 = vmatpush1.msra.mxu0 %v544
    %668 = vmatprep.subr.mxu0 0.0
    %669 = vmatpush1.msra.mxu0 %v541
    %670 = vmatprep.subr.mxu0 0.0
    %671 = vmatpush1.msra.mxu0 %v538
    %672 = vmatprep.subr.mxu0 0.0
    %673 = vmatpush1.msra.mxu0 %v535
    %674 = vmatprep.subr.mxu0 0.0
    %675 = vmatpush1.msra.mxu0 %v532
    %676 = vmatprep.subr.mxu0 0.0
    %677 = vmatpush1.msra.mxu0 %v529
    %678 = vmatprep.subr.mxu0 0.0
    %679 = vmatpush2.msra.mxu0 0.0
    %680 = vmatprep.subr.mxu0 0.0
    %681 = vmatpush2.msra.mxu0 0.0
    %682 = vmatprep.subr.mxu0 0.0
    %683 = vmatpush2.msra.mxu0 0.0
    %684 = vmatprep.subr.mxu0 0.0
    %685 = vmatpush2.msra.mxu0 0.0
    %686 = vmatprep.subr.mxu0 0.0
    %687 = vmatpush2.msra.mxu0 0.0
    %688 = vmatprep.subr.mxu0 0.0
    %689 = vmatpush2.msra.mxu0 0.0
    %690 = vmatprep.subr.mxu0 0.0
    %691 = vmatpush2.msra.mxu0 0.0
    %692 = vmatprep.subr.mxu0 0.0
    %693 = vmatpush2.msra.mxu0 0.0
    %694 = vmatprep.subr.mxu0 0.0
    %695 = vmatpush2.msra.mxu0 0.0
    %696 = vmatprep.subr.mxu0 0.0
    %697 = vmatpush2.msra.mxu0 0.0
    %698 = vmatprep.subr.mxu0 0.0
    %699 = vmatpush2.msra.mxu0 0.0
    %700 = vmatprep.subr.mxu0 0.0
    %701 = vmatpush2.msra.mxu0 0.0
    %702 = vmatprep.subr.mxu0 0.0
    %703 = vmatpush2.msra.mxu0 0.0
    %704 = vmatprep.subr.mxu0 0.0
    %705 = vmatpush2.msra.mxu0 0.0
    %706 = vmatprep.subr.mxu0 0.0
    %707 = vmatpush2.msra.mxu0 0.0
    %708 = vmatprep.subr.mxu0 0.0
    %709 = vmatpush2.msra.mxu0 0.0
    %710 = vmatprep.mubr.f32.mxu0 0.0
    %711 = vmatmul.mubr.f32.gmra.mxu0 %v319
    %v712 = vpop.f32.mrf.mxu0
    %v713 = vadd.f32 0.0, %v712
    %v714 = vpop.f32.mrf.mxu0
    %715 = vdwg.mxu0
    %v716 = vadd.f32 %v453, %v642
    %v717 = vxor.u32 %v716, 2147483648
    %v718 = vmul.f32 %v717, 1.442695
    %v719 = vpow.pop %v718
    %v720 = vadd.f32 %v719, 1.0
    %v721 = vrcp.pop %v720
    %v722 = vmul.f32 1.0, %v721
    %v723 = vadd.f32 %v455, %v644
    %v724 = vxor.u32 %v723, 2147483648
    %v725 = vmul.f32 %v724, 1.442695
    %v726 = vpow.pop %v725
    %v727 = vadd.f32 %v726, 1.0
    %v728 = vrcp.pop %v727
    %v729 = vmul.f32 1.0, %v728
    %v730 = vld [vmem:[#allocation8 + $0x1b] ss:$0 sm:$0xff]
    %v731 = vadd.f32 %v713, %v730
    %v732 = vmul.f32 %v722, %v731
    %v733 = vadd.f32 %v524, %v732
    %v734 = vtanh.pop %v733
    %v735 = vsub.f32 1.0, %v729
    %v736 = vmul.f32 %v735, %v734
    %v737 = vmul.f32 %v729, %v319
    %v738 = vadd.f32 %v736, %v737
    %739 = vst [vmem:[#allocation10] sm:$0xff] %v738
    %v740 = vld [vmem:[#allocation8 + $0x6] ss:$0 sm:$0xff]
    %v741 = vld [vmem:[#allocation8 + $0x7] ss:$0 sm:$0xff]
    %742 = vadd.xlane.f32.xlu0 %v738
    %v743 = vpop.xlane.xlu0 %742
    %v744 = vmul.f32 %v743, 0.03125
    %v745 = vsub.f32 %v738, %v744
    %v746 = vmul.f32 %v745, %v193
    %v747 = vmul.f32 %v746, %v746
    %748 = vadd.xlane.f32.xlu0 %v747
    %v749 = vpop.xlane.xlu0 %748
    %v750 = vmul.f32 %v749, 0.03125
    %v751 = vadd.f32 %v750, 1e-05
    %v752 = vrsqrt.pop %v751
    %v753 = vmul.f32 %v746, %v752
    %v754 = vmul.f32 %v753, %v740
    %v755 = vadd.f32 %v754, %v741
    %v756 = vld [vmem:[#allocation8 + $0x1c] ss:$0 sm:$0xff]
    %v757 = vmul.f32 %v755, %v756
    %758 = vadd.xlane.f32.xlu0 %v757
    %v759 = vpop.xlane.xlu0 %758
    %v760 = vld [vmem:[#allocation8 + $0x1d] ss:$0 sm:$0xff]
    %761 = vadd.xlane.f32.xlu0 %v760
    %v762 = vpop.xlane.xlu0 %761
    %v763 = vadd.f32 %v759, %v762
    %vm764 = vcmask 7168
    %765 = vst.msk [vmem:[%s6] sm:$0xff] %vm764, %v763
    // Predicated region
    $region42: #{tpu_custom_call.1} parent=1 // pred_check
      _
    $region43: #{tpu_custom_call.1} parent=1 // pred_check_branch
      %767 = sbr.rel (0) target = $region45
    $region44: #{tpu_custom_call.1} parent=1 // pred_region
      _
    $region45: #{tpu_custom_call.1} parent=1 // pred_fallthru
      _
    // Predicated region
    $region46: #{tpu_custom_call.1} parent=1 // pred_check
      _
    $region47: #{tpu_custom_call.1} parent=1 // pred_check_branch
      %769 = sbr.rel (0) target = $region49
    $region48: #{tpu_custom_call.1} parent=1 // pred_region
      %s771 = ssub.s32 128, 128
      %772 = vsyncadd [#allocation4], %s771
      %s774 = sshll.u32 [#allocation10], 4
      %s775 = int_to_ptr.vmem [resolvable:$true] %s774
      %777 = dma.vmem_to_hbm [thread:$0]  %s775, 128, %s7, [#allocation4]
    $region49: #{tpu_custom_call.1} parent=1 // pred_fallthru
      _
    // Predicated region
    $region50: #{tpu_custom_call.1} parent=1 // pred_check
      _
    $region51: #{tpu_custom_call.1} parent=1 // pred_check_branch
      %779 = sbr.rel (0) target = $region53
    $region52: #{tpu_custom_call.1} parent=1 // pred_region
      _
    $region53: #{tpu_custom_call.1} parent=1 // pred_fallthru
      _
    // Predicated region
    $region54: #{tpu_custom_call.1} parent=1 // pred_check
      _
    $region55: #{tpu_custom_call.1} parent=1 // pred_check_branch
      %781 = sbr.rel (0) target = $region57
    $region56: #{tpu_custom_call.1} parent=1 // pred_region
      %782 = dma.done [#allocation4], 128
    $region57: #{tpu_custom_call.1} parent=1 // pred_fallthru
      _
    %783 = vsyncpa [#allocation3], 1
    %784 = vsyncpa [#allocation6], 1
    %785 = vsyncpa [#allocation9], 1
    %786 = vsyncpa [#allocation4], 1

</llo_original>
